<compile_context>
chip_gen: v7x
topology: tpu7x:2x2x1
jax: 0.10.0
libtpu: 0.0.40
codegen_flags: <defaults>
</compile_context>

<pallas_src>
import jax
import jax.numpy as jnp
from jax.experimental import pallas as pl
from jax.experimental.pallas import tpu as pltpu


def _make_edge_loss_kernel(tb, L, W, n_chunks):
    """Kernel over (tb, L) blocks: tb image planes x L flattened-pixel chunk."""
    n_groups = tb // 8

    def fold8(x):
        # (tb, n) -> (8, n) sublane-group fold: pure vreg adds, no XLU.
        if n_groups == 1:
            return x
        return jnp.sum(x.reshape(n_groups, 8, x.shape[-1]), axis=0)

    def kernel(o_ref, t_ref, l1_ref, gx_ref, gy_ref, gyb_ref, co_ref, ct_ref):
        outer = pl.program_id(1)
        chunk = pl.program_id(2)

        @pl.when(jnp.logical_and(outer == 0, chunk == 0))
        def _init():
            l1_ref[...] = jnp.zeros_like(l1_ref)
            gx_ref[...] = jnp.zeros_like(gx_ref)
            gy_ref[...] = jnp.zeros_like(gy_ref)
            gyb_ref[...] = jnp.zeros_like(gyb_ref)

        o = o_ref[...].astype(jnp.float32)   # (tb, L)
        t = t_ref[...].astype(jnp.float32)   # (tb, L)

        # L1 term (every lane valid; zero-pad lanes/planes contribute 0).
        l1_ref[0] += fold8(jnp.abs(o - t))

        # x-gradient term: neighbour one lane ahead.  Row-seam / wrap lanes are
        # removed by mask_x in the wrapper (mask depends only on lane position).
        if W > 1:
            gx_o = jnp.abs(pltpu.roll(o, shift=L - 1, axis=1) - o)
            gx_t = jnp.abs(pltpu.roll(t, shift=L - 1, axis=1) - t)
            gx_ref[0] += fold8(jnp.abs(gx_o - gx_t))

        # y-gradient term: neighbour W lanes ahead inside the chunk.  The chunk's
        # last image row (wrap lanes) is removed by mask_y in the wrapper; pairs
        # that straddle a chunk seam are added below from the carry row.
        if L > W:
            gy_o = jnp.abs(pltpu.roll(o, shift=L - W, axis=1) - o)
            gy_t = jnp.abs(pltpu.roll(t, shift=L - W, axis=1) - t)
            gy_ref[0] += fold8(jnp.abs(gy_o - gy_t))

        if n_chunks > 1:
            # y-gradient pairs across the chunk seam: previous chunk's last image
            # row (carry) vs this chunk's first image row.  Always valid.
            @pl.when(chunk > 0)
            def _seam():
                d_o = jnp.abs(o[:, :W] - co_ref[...])
                d_t = jnp.abs(t[:, :W] - ct_ref[...])
                gyb_ref[0] += fold8(jnp.abs(d_o - d_t))

            # Update carry with this chunk's last image row.
            co_ref[...] = o[:, L - W:]
            ct_ref[...] = t[:, L - W:]

    return kernel


def edge_aware_loss(output, target, lambda_grad=0.1, *,
                    block_budget_bytes=4 << 20,      # per-input block (f32-equiv)
                    _max_lanes_per_block=32768):     # 8-row block <= ~1 MiB
    """JAX/Pallas equivalent of EdgeAwareLoss.forward (returns an f32 scalar)."""
    assert output.shape == target.shape
    B, C, H, W = output.shape
    HW = H * W
    n_planes = B * C
    in_itemsize = output.dtype.itemsize

    # ---- HW-axis chunking (row-aligned, 128-lane-aligned) --------------------
    if HW <= _max_lanes_per_block:
        L = ((HW + 127) // 128) * 128          # pad ragged lane counts to 128
        n_chunks = 1
    else:
        cand = [r for r in range(1, H)
                if H % r == 0 and r * W <= _max_lanes_per_block
                and (r * W) % 128 == 0]
        if cand:
            L = max(cand) * W
            n_chunks = H // (L // W)
        else:
            # TODO(synk): no legal chunking for this (H, W); whole-plane fallback.
            L = ((HW + 127) // 128) * 128
            n_chunks = 1
    valid_lanes = L if n_chunks > 1 else HW     # real (un-padded) lanes per chunk

    # ---- plane-fusion factor tb (multiple of 8) -------------------------------
    tb = max(8, (block_budget_bytes // (L * 4)) // 8 * 8)
    if n_planes >= 16:
        # keep >= 2 plane-blocks so both TensorCores get work (v7x megacore)
        tb = min(tb, ((pl.cdiv(n_planes, 2) + 7) // 8) * 8)
    tb = min(tb, ((n_planes + 7) // 8) * 8)

    n_plane_blocks = pl.cdiv(n_planes, tb)
    P = 2 if n_plane_blocks >= 2 else 1         # megacore partitions
    n_outer = pl.cdiv(n_plane_blocks, P)
    n_pad = P * n_outer * tb

    # ---- layout: (B*C, H*W) lane-dense, zero padding contributes exactly 0 ----
    o2 = output.reshape(n_planes, HW)
    t2 = target.reshape(n_planes, HW)
    w_total = n_chunks * L
    if n_pad != n_planes or w_total != HW:
        o2 = jnp.pad(o2, ((0, n_pad - n_planes), (0, w_total - HW)))
        t2 = jnp.pad(t2, ((0, n_pad - n_planes), (0, w_total - HW)))

    kernel = _make_edge_loss_kernel(tb, L, W, n_chunks)

    in_spec = pl.BlockSpec((tb, L), lambda p, o, c: (p * n_outer + o, c))
    acc_spec = pl.BlockSpec((1, 8, L), lambda p, o, c: (p, 0, 0))
    gyb_spec = pl.BlockSpec((1, 8, W), lambda p, o, c: (p, 0, 0))

    # ---- honest VMEM accounting ------------------------------------------------
    blk_in = tb * L * in_itemsize
    blk_f32 = tb * L * 4
    acc_bytes = (3 * 8 * L + 8 * W) * 4
    vmem_est = (2 * 2 * blk_in          # 2 inputs x 2 pipeline buffers
                + 6 * blk_f32           # rolled / diff f32 temporaries at peak
                + 2 * acc_bytes         # resident accumulators (+ writeback buf)
                + 2 * tb * W * 4        # carry scratch
                + (4 << 20))            # headroom
    vmem_limit = int(min(max(vmem_est, 32 << 20), 128 << 20))

    n_total = n_pad * w_total
    cost = pl.CostEstimate(
        flops=int(20 * n_total),
        transcendentals=0,
        bytes_accessed=int(2 * n_total * in_itemsize + 2 * P * acc_bytes),
    )

    l1_p, gx_p, gy_p, gyb_p = pl.pallas_call(
        kernel,
        out_shape=(
            jax.ShapeDtypeStruct((P, 8, L), jnp.float32),
            jax.ShapeDtypeStruct((P, 8, L), jnp.float32),
            jax.ShapeDtypeStruct((P, 8, L), jnp.float32),
            jax.ShapeDtypeStruct((P, 8, W), jnp.float32),
        ),
        grid_spec=pltpu.PrefetchScalarGridSpec(
            num_scalar_prefetch=0,
            grid=(P, n_outer, n_chunks),
            in_specs=[in_spec, in_spec],
            out_specs=[acc_spec, acc_spec, acc_spec, gyb_spec],
            scratch_shapes=[pltpu.VMEM((tb, W), jnp.float32),
                            pltpu.VMEM((tb, W), jnp.float32)],
        ),
        compiler_params=pltpu.CompilerParams(
            dimension_semantics=("parallel", "arbitrary", "arbitrary"),
            vmem_limit_bytes=vmem_limit,
        ),
        cost_estimate=cost,
    )(o2, t2)

    # ---- apply seam masks once, to the lane-wise partial sums ------------------
    lane = jnp.arange(L, dtype=jnp.int32)
    mask_x = (((lane % W) != (W - 1)) & (lane < valid_lanes)).astype(jnp.float32)
    mask_y = (lane < (valid_lanes - W)).astype(jnp.float32)

    l1_sum = jnp.sum(l1_p)
    gx_sum = jnp.sum(jnp.sum(gx_p, axis=(0, 1)) * mask_x)
    gy_sum = jnp.sum(jnp.sum(gy_p, axis=(0, 1)) * mask_y) + jnp.sum(gyb_p)

    n = jnp.float32(B * C * H * W)
    return (l1_sum + jnp.float32(lambda_grad) * (gx_sum + gy_sum)) / n


def _edge_aware_loss_ref(output, target, lambda_grad=0.1):
    """Pure-JAX reference mirroring the PyTorch code exactly."""
    def gradients(x):
        gx = jnp.zeros_like(x)
        gy = jnp.zeros_like(x)
        gx = gx.at[..., :-1].set(jnp.abs(x[..., 1:] - x[..., :-1]))
        gy = gy.at[..., :-1, :].set(jnp.abs(x[..., 1:, :] - x[..., :-1, :]))
        return gx, gy

    l1 = jnp.mean(jnp.abs(output - target))
    gx_o, gy_o = gradients(output)
    gx_t, gy_t = gradients(target)
    grad_loss = jnp.mean(jnp.abs(gx_o - gx_t)) + jnp.mean(jnp.abs(gy_o - gy_t))
    return l1 + lambda_grad * grad_loss


if __name__ == "__main__":
    key = jax.random.PRNGKey(0)
    ks = jax.random.split(key, 6)

    # 1) base shape implied by the module: (B, C, H, W) = (2, 4, 16, 16)
    out1 = jax.random.normal(ks[0], (2, 4, 16, 16), dtype=jnp.float32)
    tgt1 = jax.random.normal(ks[1], (2, 4, 16, 16), dtype=jnp.float32)
    loss1 = jax.block_until_ready(edge_aware_loss(out1, tgt1, 0.1))
    ref1 = _edge_aware_loss_ref(out1, tgt1, 0.1)
    assert jnp.allclose(loss1, ref1, rtol=1e-5, atol=1e-5), (loss1, ref1)

    # 2) H*W not a multiple of 128 (exercises the lane-padded path)
    out2 = jax.random.normal(ks[2], (2, 3, 10, 24), dtype=jnp.float32)
    tgt2 = jax.random.normal(ks[3], (2, 3, 10, 24), dtype=jnp.float32)
    loss2 = jax.block_until_ready(edge_aware_loss(out2, tgt2, 0.1))
    ref2 = _edge_aware_loss_ref(out2, tgt2, 0.1)
    assert jnp.allclose(loss2, ref2, rtol=1e-5, atol=1e-5), (loss2, ref2)

    # 3) force HW-axis chunking to exercise the chunk-seam carry path
    out3 = jax.random.normal(ks[4], (1, 2, 8, 128), dtype=jnp.float32)
    tgt3 = jax.random.normal(ks[5], (1, 2, 8, 128), dtype=jnp.float32)
    loss3 = jax.block_until_ready(
        edge_aware_loss(out3, tgt3, 0.1, _max_lanes_per_block=256))
    ref3 = _edge_aware_loss_ref(out3, tgt3, 0.1)
    assert jnp.allclose(loss3, ref3, rtol=1e-5, atol=1e-5), (loss3, ref3)

    print("KERNEL_OK")
</pallas_src>

<mosaic_0001>
module attributes {stable_mosaic.version = 11 : i64} {
  func.func @kernel(%arg0: i32, %arg1: i32, %arg2: i32, %arg3: memref<8x256xf32, #tpu.memory_space<vmem>>, %arg4: memref<8x256xf32, #tpu.memory_space<vmem>>, %arg5: memref<1x8x256xf32, #tpu.memory_space<vmem>>, %arg6: memref<1x8x256xf32, #tpu.memory_space<vmem>>, %arg7: memref<1x8x256xf32, #tpu.memory_space<vmem>>, %arg8: memref<1x8x16xf32, #tpu.memory_space<vmem>>, %arg9: memref<8x16xf32, #tpu.memory_space<vmem>>, %arg10: memref<8x16xf32, #tpu.memory_space<vmem>>) attributes {dimension_semantics = [#tpu.dimension_semantics<parallel>, #tpu.dimension_semantics<arbitrary>, #tpu.dimension_semantics<arbitrary>], iteration_bounds = array<i64: 1, 1, 1>, scalar_prefetch = 0 : i64, scratch_operands = 2 : i64, tpu.core_type = #tpu.core_type<tc>, window_params = [{transform_indices = @transform_0, window_bounds = array<i64: 8, 256>}, {transform_indices = @transform_1, window_bounds = array<i64: 8, 256>}, {transform_indices = @transform_2, window_bounds = array<i64: 1, 8, 256>}, {transform_indices = @transform_3, window_bounds = array<i64: 1, 8, 256>}, {transform_indices = @transform_4, window_bounds = array<i64: 1, 8, 256>}, {transform_indices = @transform_5, window_bounds = array<i64: 1, 8, 16>}]} {
    %c0_i32 = arith.constant 0 : i32
    %0 = arith.cmpi eq, %arg1, %c0_i32 : i32
    %c0_i32_0 = arith.constant 0 : i32
    %1 = arith.cmpi eq, %arg2, %c0_i32_0 : i32
    %2 = arith.andi %0, %1 : i1
    %3 = arith.extui %2 : i1 to i32
    %c0_i32_1 = arith.constant 0 : i32
    %4 = arith.cmpi ne, %3, %c0_i32_1 : i32
    scf.if %4 {
      %cst = arith.constant 0.000000e+00 : f32
      %43 = vector.broadcast %cst : f32 to vector<1x8x256xf32>
      %c0_25 = arith.constant 0 : index
      %c0_26 = arith.constant 0 : index
      %c0_27 = arith.constant 0 : index
      %44 = vector.load %arg5[%c0_25, %c0_26, %c0_27] : memref<1x8x256xf32, #tpu.memory_space<vmem>>, vector<1x8x256xf32>
      tpu.vector_store %arg5[%c0_25, %c0_26, %c0_27], %43 {strides = array<i32>} : memref<1x8x256xf32, #tpu.memory_space<vmem>>, vector<1x8x256xf32>,
      %cst_28 = arith.constant 0.000000e+00 : f32
      %45 = vector.broadcast %cst_28 : f32 to vector<1x8x256xf32>
      %c0_29 = arith.constant 0 : index
      %c0_30 = arith.constant 0 : index
      %c0_31 = arith.constant 0 : index
      %46 = vector.load %arg6[%c0_29, %c0_30, %c0_31] : memref<1x8x256xf32, #tpu.memory_space<vmem>>, vector<1x8x256xf32>
      tpu.vector_store %arg6[%c0_29, %c0_30, %c0_31], %45 {strides = array<i32>} : memref<1x8x256xf32, #tpu.memory_space<vmem>>, vector<1x8x256xf32>,
      %cst_32 = arith.constant 0.000000e+00 : f32
      %47 = vector.broadcast %cst_32 : f32 to vector<1x8x256xf32>
      %c0_33 = arith.constant 0 : index
      %c0_34 = arith.constant 0 : index
      %c0_35 = arith.constant 0 : index
      %48 = vector.load %arg7[%c0_33, %c0_34, %c0_35] : memref<1x8x256xf32, #tpu.memory_space<vmem>>, vector<1x8x256xf32>
      tpu.vector_store %arg7[%c0_33, %c0_34, %c0_35], %47 {strides = array<i32>} : memref<1x8x256xf32, #tpu.memory_space<vmem>>, vector<1x8x256xf32>,
      %cst_36 = arith.constant 0.000000e+00 : f32
      %49 = vector.broadcast %cst_36 : f32 to vector<1x8x16xf32>
      %c0_37 = arith.constant 0 : index
      %c0_38 = arith.constant 0 : index
      %c0_39 = arith.constant 0 : index
      %50 = vector.load %arg8[%c0_37, %c0_38, %c0_39] : memref<1x8x16xf32, #tpu.memory_space<vmem>>, vector<1x8x16xf32>
      tpu.vector_store %arg8[%c0_37, %c0_38, %c0_39], %49 {strides = array<i32>} : memref<1x8x16xf32, #tpu.memory_space<vmem>>, vector<1x8x16xf32>,
    } else {
    }
    %c0 = arith.constant 0 : index
    %c0_2 = arith.constant 0 : index
    %5 = vector.load %arg3[%c0, %c0_2] : memref<8x256xf32, #tpu.memory_space<vmem>>, vector<8x256xf32>
    %c0_3 = arith.constant 0 : index
    %c0_4 = arith.constant 0 : index
    %6 = vector.load %arg4[%c0_3, %c0_4] : memref<8x256xf32, #tpu.memory_space<vmem>>, vector<8x256xf32>
    %c0_5 = arith.constant 0 : index
    %c0_6 = arith.constant 0 : index
    %c0_7 = arith.constant 0 : index
    %7 = vector.load %arg5[%c0_5, %c0_6, %c0_7] : memref<1x8x256xf32, #tpu.memory_space<vmem>>, vector<1x8x256xf32>
    %8 = vector.shape_cast %7 : vector<1x8x256xf32> to vector<8x256xf32>
    %9 = arith.subf %5, %6 : vector<8x256xf32>
    %10 = math.absf %9 : vector<8x256xf32>
    %11 = arith.addf %8, %10 : vector<8x256xf32>
    %c0_8 = arith.constant 0 : index
    %c0_9 = arith.constant 0 : index
    %c0_10 = arith.constant 0 : index
    %12 = vector.load %arg5[%c0_8, %c0_9, %c0_10] : memref<1x8x256xf32, #tpu.memory_space<vmem>>, vector<1x8x256xf32>
    %13 = vector.shape_cast %12 : vector<1x8x256xf32> to vector<8x256xf32>
    %14 = vector.shape_cast %11 : vector<8x256xf32> to vector<1x8x256xf32>
    tpu.vector_store %arg5[%c0_8, %c0_9, %c0_10], %14 {strides = array<i32>} : memref<1x8x256xf32, #tpu.memory_space<vmem>>, vector<1x8x256xf32>,
    %c255_i32 = arith.constant 255 : i32
    %15 = tpu.dynamic_rotate %5 by %c255_i32 dim 1 : vector<8x256xf32>, i32 -> vector<8x256xf32>
    %16 = arith.subf %15, %5 : vector<8x256xf32>
    %17 = math.absf %16 : vector<8x256xf32>
    %c255_i32_11 = arith.constant 255 : i32
    %18 = tpu.dynamic_rotate %6 by %c255_i32_11 dim 1 : vector<8x256xf32>, i32 -> vector<8x256xf32>
    %19 = arith.subf %18, %6 : vector<8x256xf32>
    %20 = math.absf %19 : vector<8x256xf32>
    %c0_12 = arith.constant 0 : index
    %c0_13 = arith.constant 0 : index
    %c0_14 = arith.constant 0 : index
    %21 = vector.load %arg6[%c0_12, %c0_13, %c0_14] : memref<1x8x256xf32, #tpu.memory_space<vmem>>, vector<1x8x256xf32>
    %22 = vector.shape_cast %21 : vector<1x8x256xf32> to vector<8x256xf32>
    %23 = arith.subf %17, %20 : vector<8x256xf32>
    %24 = math.absf %23 : vector<8x256xf32>
    %25 = arith.addf %22, %24 : vector<8x256xf32>
    %c0_15 = arith.constant 0 : index
    %c0_16 = arith.constant 0 : index
    %c0_17 = arith.constant 0 : index
    %26 = vector.load %arg6[%c0_15, %c0_16, %c0_17] : memref<1x8x256xf32, #tpu.memory_space<vmem>>, vector<1x8x256xf32>
    %27 = vector.shape_cast %26 : vector<1x8x256xf32> to vector<8x256xf32>
    %28 = vector.shape_cast %25 : vector<8x256xf32> to vector<1x8x256xf32>
    tpu.vector_store %arg6[%c0_15, %c0_16, %c0_17], %28 {strides = array<i32>} : memref<1x8x256xf32, #tpu.memory_space<vmem>>, vector<1x8x256xf32>,
    %c240_i32 = arith.constant 240 : i32
    %29 = tpu.dynamic_rotate %5 by %c240_i32 dim 1 : vector<8x256xf32>, i32 -> vector<8x256xf32>
    %30 = arith.subf %29, %5 : vector<8x256xf32>
    %31 = math.absf %30 : vector<8x256xf32>
    %c240_i32_18 = arith.constant 240 : i32
    %32 = tpu.dynamic_rotate %6 by %c240_i32_18 dim 1 : vector<8x256xf32>, i32 -> vector<8x256xf32>
    %33 = arith.subf %32, %6 : vector<8x256xf32>
    %34 = math.absf %33 : vector<8x256xf32>
    %c0_19 = arith.constant 0 : index
    %c0_20 = arith.constant 0 : index
    %c0_21 = arith.constant 0 : index
    %35 = vector.load %arg7[%c0_19, %c0_20, %c0_21] : memref<1x8x256xf32, #tpu.memory_space<vmem>>, vector<1x8x256xf32>
    %36 = vector.shape_cast %35 : vector<1x8x256xf32> to vector<8x256xf32>
    %37 = arith.subf %31, %34 : vector<8x256xf32>
    %38 = math.absf %37 : vector<8x256xf32>
    %39 = arith.addf %36, %38 : vector<8x256xf32>
    %c0_22 = arith.constant 0 : index
    %c0_23 = arith.constant 0 : index
    %c0_24 = arith.constant 0 : index
    %40 = vector.load %arg7[%c0_22, %c0_23, %c0_24] : memref<1x8x256xf32, #tpu.memory_space<vmem>>, vector<1x8x256xf32>
    %41 = vector.shape_cast %40 : vector<1x8x256xf32> to vector<8x256xf32>
    %42 = vector.shape_cast %39 : vector<8x256xf32> to vector<1x8x256xf32>
    tpu.vector_store %arg7[%c0_22, %c0_23, %c0_24], %42 {strides = array<i32>} : memref<1x8x256xf32, #tpu.memory_space<vmem>>, vector<1x8x256xf32>,
    return
  }
  func.func @transform_0(%arg0: i32, %arg1: i32, %arg2: i32) -> (i32, i32) {
    %c1_i32 = arith.constant 1 : i32
    %0 = arith.muli %arg0, %c1_i32 : i32
    %1 = arith.addi %0, %arg1 : i32
    %c0_i32 = arith.constant 0 : i32
    return %1, %arg2 : i32, i32
  }
  func.func @transform_1(%arg0: i32, %arg1: i32, %arg2: i32) -> (i32, i32) {
    %c1_i32 = arith.constant 1 : i32
    %0 = arith.muli %arg0, %c1_i32 : i32
    %1 = arith.addi %0, %arg1 : i32
    %c0_i32 = arith.constant 0 : i32
    return %1, %arg2 : i32, i32
  }
  func.func @transform_2(%arg0: i32, %arg1: i32, %arg2: i32) -> (i32, i32, i32) {
    %c0_i32 = arith.constant 0 : i32
    %c0_i32_0 = arith.constant 0 : i32
    %c0_i32_1 = arith.constant 0 : i32
    return %arg0, %c0_i32, %c0_i32_0 : i32, i32, i32
  }
  func.func @transform_3(%arg0: i32, %arg1: i32, %arg2: i32) -> (i32, i32, i32) {
    %c0_i32 = arith.constant 0 : i32
    %c0_i32_0 = arith.constant 0 : i32
    %c0_i32_1 = arith.constant 0 : i32
    return %arg0, %c0_i32, %c0_i32_0 : i32, i32, i32
  }
  func.func @transform_4(%arg0: i32, %arg1: i32, %arg2: i32) -> (i32, i32, i32) {
    %c0_i32 = arith.constant 0 : i32
    %c0_i32_0 = arith.constant 0 : i32
    %c0_i32_1 = arith.constant 0 : i32
    return %arg0, %c0_i32, %c0_i32_0 : i32, i32, i32
  }
  func.func @transform_5(%arg0: i32, %arg1: i32, %arg2: i32) -> (i32, i32, i32) {
    %c0_i32 = arith.constant 0 : i32
    %c0_i32_0 = arith.constant 0 : i32
    %c0_i32_1 = arith.constant 0 : i32
    return %arg0, %c0_i32, %c0_i32_0 : i32, i32, i32
  }
}

</mosaic_0001>

<llo_original>
// kernel: tpu_custom_call.1
$region0: #{tpu_custom_call.1}
  #allocation0 [shape = 'u32[]', space=smem, size = 0x4, offset = 0x4, fixed_abs, tag = 'smem constant byte address 0x4 - core index']
  #allocation1 [shape = 'u32[144,128]{1,0:T(1,128)}', space=vmem, size = 0x12000, scoped, tag = 'internal scratch']
  #allocation2 [shape = 'f32[8,16]{1,0:T(8,128)}', space=vmem, size = 0x1000, scoped, tag = 'scratch operand']
  #allocation3 [shape = 'f32[8,16]{1,0:T(8,128)}', space=vmem, size = 0x1000, scoped, tag = 'scratch operand']
  %s0 = inlined_call_operand.hbm [shape: f32[8,256], index: 0, kind: input, shape index: {}]
  %s1 = inlined_call_operand.hbm [shape: f32[8,256], index: 1, kind: input, shape index: {}]
  %s2 = inlined_call_operand.hbm [shape: f32[1,8,256], index: 2, kind: output, shape index: {0}]
  %s3 = inlined_call_operand.hbm [shape: f32[1,8,256], index: 3, kind: output, shape index: {1}]
  %s4 = inlined_call_operand.hbm [shape: f32[1,8,256], index: 4, kind: output, shape index: {2}]
  %s5 = inlined_call_operand.hbm [shape: f32[1,8,16], index: 5, kind: output, shape index: {3}]
  %6 = xla_tuple %s2, %s3, %s4, %s5
  %s7 = sld [smem:[#allocation0]]
  $region54: #{tpu_custom_call.1} parent=0
    _
  %s9 = ssub.s32 1, %s7
  %s10 = scalar_select 0, %s9, %s7
  $region1: #{tpu_custom_call.1} parent=0
    #allocation4 [shape = 'u8[8192]{0}', space=vmem, size = 0x2000, scoped, tag = 'input window, operand 0, single buffered']
    #allocation5 [shape = 's32[1]{0}', space=sflag, size = 0x4, scoped, tag = 'scoped memory for tpu_custom_call.1']
    #allocation6 [shape = 's32[1]{0}', space=sflag, size = 0x4, scoped, tag = 'scoped memory for tpu_custom_call.1']
    #allocation7 [shape = 'u8[8192]{0}', space=vmem, size = 0x2000, scoped, tag = 'input window, operand 1, single buffered']
    #allocation8 [shape = 's32[1]{0}', space=sflag, size = 0x4, scoped, tag = 'scoped memory for tpu_custom_call.1']
    #allocation9 [shape = 'u8[8192]{0}', space=vmem, size = 0x2000, scoped, tag = 'output window, operand 0, single buffered']
    #allocation10 [shape = 'u8[8192]{0}', space=vmem, size = 0x2000, scoped, tag = 'output window, operand 1, single buffered']
    #allocation11 [shape = 's32[1]{0}', space=sflag, size = 0x4, scoped, tag = 'scoped memory for tpu_custom_call.1']
    #allocation12 [shape = 'u8[8192]{0}', space=vmem, size = 0x2000, scoped, tag = 'output window, operand 2, single buffered']
    #allocation13 [shape = 'u8[4096]{0}', space=vmem, size = 0x1000, scoped, tag = 'output window, operand 3, single buffered']
    #allocation14 [shape = 's32[1]{0}', space=sflag, size = 0x4, scoped, tag = 'scoped memory for tpu_custom_call.1']
    %11 = vsyncpa [#allocation5], 0
    %12 = vsyncpa [#allocation8], 0
    %13 = vsyncpa [#allocation6], 0
    %14 = vsyncpa [#allocation11], 0
    %15 = vsyncpa [#allocation14], 0
    // Predicated region
    $region2: #{tpu_custom_call.1} parent=1 // pred_check
      _
    $region3: #{tpu_custom_call.1} parent=1 // pred_check_branch
      %17 = sbr.rel (0) target = $region5
    $region4: #{tpu_custom_call.1} parent=1 // pred_region
      %s18 = sadd.s32 0, 0
      %s20 = ssub.s32 256, 256
      %21 = vsyncadd [#allocation5], %s20
      %s22 = smul.addr %s18, 2
      %s23 = smul.addr %s22, 128
      %s24 = scalar_lea.hbm %s0, %s23
      %s26 = sshll.u32 [#allocation4], 4
      %s27 = int_to_ptr.vmem [resolvable:$true] %s26
      %29 = dma.hbm_to_vmem [thread:$0]  %s24, 256, %s27, [#allocation5]
    $region5: #{tpu_custom_call.1} parent=1 // pred_fallthru
      _
    // Predicated region
    $region6: #{tpu_custom_call.1} parent=1 // pred_check
      _
    $region7: #{tpu_custom_call.1} parent=1 // pred_check_branch
      %31 = sbr.rel (0) target = $region9
    $region8: #{tpu_custom_call.1} parent=1 // pred_region
      %s32 = sadd.s32 0, 0
      %s34 = ssub.s32 256, 256
      %35 = vsyncadd [#allocation8], %s34
      %s36 = smul.addr %s32, 2
      %s37 = smul.addr %s36, 128
      %s38 = scalar_lea.hbm %s1, %s37
      %s40 = sshll.u32 [#allocation7], 4
      %s41 = int_to_ptr.vmem [resolvable:$true] %s40
      %43 = dma.hbm_to_vmem [thread:$0]  %s38, 256, %s41, [#allocation8]
    $region9: #{tpu_custom_call.1} parent=1 // pred_fallthru
      _
    // Predicated region
    $region10: #{tpu_custom_call.1} parent=1 // pred_check
      _
    $region11: #{tpu_custom_call.1} parent=1 // pred_check_branch
      %45 = sbr.rel (0) target = $region13
    $region12: #{tpu_custom_call.1} parent=1 // pred_region
      %46 = dma.done [#allocation5], 256
    $region13: #{tpu_custom_call.1} parent=1 // pred_fallthru
      _
    // Predicated region
    $region14: #{tpu_custom_call.1} parent=1 // pred_check
      _
    $region15: #{tpu_custom_call.1} parent=1 // pred_check_branch
      %48 = sbr.rel (0) target = $region17
    $region16: #{tpu_custom_call.1} parent=1 // pred_region
      %49 = dma.done [#allocation8], 256
    $region17: #{tpu_custom_call.1} parent=1 // pred_fallthru
      _
    %s50 = sadd.s32 0, 0
    %s51 = sadd.s32 0, 0
    %p52 = scmp.eq.s32.totalorder 0, 0
    %p53 = scmp.eq.s32.totalorder 0, 0
    %p54 = pnand %p52, %p53
    %p55 = pneg %p54
    // Predicated region
    $region18: #{tpu_custom_call.1} parent=1 // pred_check
      _
    $region19: #{tpu_custom_call.1} parent=1 // pred_check_branch
      %57 = sbr.rel (%p54) target = $region21
    $region20: #{tpu_custom_call.1} parent=1 // pred_region
      %58 = vst [vmem:[#allocation9] sm:$0xff] 0.0
      %59 = vst [vmem:[#allocation9 + $0x8] sm:$0xff] 0.0
      %60 = vst [vmem:[#allocation10] sm:$0xff] 0.0
      %61 = vst [vmem:[#allocation10 + $0x8] sm:$0xff] 0.0
      %62 = vst [vmem:[#allocation12] sm:$0xff] 0.0
      %63 = vst [vmem:[#allocation12 + $0x8] sm:$0xff] 0.0
      %vm64 = vcmask 130048
      %65 = vst.msk [vmem:[#allocation13] sm:$0xff] %vm64, 0.0
    $region21: #{tpu_custom_call.1} parent=1 // pred_fallthru
      _
    %v66 = vld [vmem:[#allocation4] sm:$0xff]
    %v67 = vld [vmem:[#allocation4 + $0x8] sm:$0xff]
    %v68 = vld [vmem:[#allocation7] sm:$0xff]
    %v69 = vld [vmem:[#allocation7 + $0x8] sm:$0xff]
    %v70 = vld [vmem:[#allocation9] sm:$0xff]
    %v71 = vld [vmem:[#allocation9 + $0x8] sm:$0xff]
    %v72 = vsub.f32 %v66, %v68
    %v73 = vsub.f32 %v67, %v69
    %v74 = vand.u32 2147483647, %v72
    %v75 = vand.u32 2147483647, %v73
    %v76 = vadd.f32 %v70, %v74
    %v77 = vadd.f32 %v71, %v75
    %78 = vst [vmem:[#allocation9] sm:$0xff] %v76
    %79 = vst [vmem:[#allocation9 + $0x8] sm:$0xff] %v77
    %80 = vrot.lane.b32.xlu0 %v66, 127
    %v81 = vpop.permute.xlu0 %80
    %82 = vrot.lane.b32.xlu0 %v67, 127
    %v83 = vpop.permute.xlu0 %82
    %v84 = vlaneseq
    %v85 = vand.u32 %v84, 127
    %vm86 = vcmp.lt.s32.totalorder %v85, 127
    %v87 = vsel %vm86, %v81, %v83
    %v88 = vsel %vm86, %v83, %v81
    %v89 = vsub.f32 %v87, %v66
    %v90 = vsub.f32 %v88, %v67
    %v91 = vand.u32 2147483647, %v89
    %v92 = vand.u32 2147483647, %v90
    %93 = vrot.lane.b32.xlu0 %v68, 127
    %v94 = vpop.permute.xlu0 %93
    %95 = vrot.lane.b32.xlu0 %v69, 127
    %v96 = vpop.permute.xlu0 %95
    %v97 = vsel %vm86, %v94, %v96
    %v98 = vsel %vm86, %v96, %v94
    %v99 = vsub.f32 %v97, %v68
    %v100 = vsub.f32 %v98, %v69
    %v101 = vand.u32 2147483647, %v99
    %v102 = vand.u32 2147483647, %v100
    %v103 = vld [vmem:[#allocation10] sm:$0xff]
    %v104 = vld [vmem:[#allocation10 + $0x8] sm:$0xff]
    %v105 = vsub.f32 %v91, %v101
    %v106 = vsub.f32 %v92, %v102
    %v107 = vand.u32 2147483647, %v105
    %v108 = vand.u32 2147483647, %v106
    %v109 = vadd.f32 %v103, %v107
    %v110 = vadd.f32 %v104, %v108
    %111 = vst [vmem:[#allocation10] sm:$0xff] %v109
    %112 = vst [vmem:[#allocation10 + $0x8] sm:$0xff] %v110
    %113 = vrot.lane.b32.xlu0 %v66, 112
    %v114 = vpop.permute.xlu0 %113
    %115 = vrot.lane.b32.xlu0 %v67, 112
    %v116 = vpop.permute.xlu0 %115
    %vm117 = vcmp.lt.s32.totalorder %v85, 112
    %v118 = vsel %vm117, %v114, %v116
    %v119 = vsel %vm117, %v116, %v114
    %v120 = vsub.f32 %v118, %v66
    %v121 = vsub.f32 %v119, %v67
    %v122 = vand.u32 2147483647, %v120
    %v123 = vand.u32 2147483647, %v121
    %124 = vrot.lane.b32.xlu0 %v68, 112
    %v125 = vpop.permute.xlu0 %124
    %126 = vrot.lane.b32.xlu0 %v69, 112
    %v127 = vpop.permute.xlu0 %126
    %v128 = vsel %vm117, %v125, %v127
    %v129 = vsel %vm117, %v127, %v125
    %v130 = vsub.f32 %v128, %v68
    %v131 = vsub.f32 %v129, %v69
    %v132 = vand.u32 2147483647, %v130
    %v133 = vand.u32 2147483647, %v131
    %v134 = vld [vmem:[#allocation12] sm:$0xff]
    %v135 = vld [vmem:[#allocation12 + $0x8] sm:$0xff]
    %v136 = vsub.f32 %v122, %v132
    %v137 = vsub.f32 %v123, %v133
    %v138 = vand.u32 2147483647, %v136
    %v139 = vand.u32 2147483647, %v137
    %v140 = vadd.f32 %v134, %v138
    %v141 = vadd.f32 %v135, %v139
    %142 = vst [vmem:[#allocation12] sm:$0xff] %v140
    %143 = vst [vmem:[#allocation12 + $0x8] sm:$0xff] %v141
    // Predicated region
    $region22: #{tpu_custom_call.1} parent=1 // pred_check
      _
    $region23: #{tpu_custom_call.1} parent=1 // pred_check_branch
      %145 = sbr.rel (0) target = $region25
    $region24: #{tpu_custom_call.1} parent=1 // pred_region
      %s147 = ssub.s32 256, 256
      %148 = vsyncadd [#allocation6], %s147
      %s150 = sshll.u32 [#allocation9], 4
      %s151 = int_to_ptr.vmem [resolvable:$true] %s150
      %153 = dma.vmem_to_hbm [thread:$0]  %s151, 256, %s2, [#allocation6]
    $region25: #{tpu_custom_call.1} parent=1 // pred_fallthru
      _
    // Predicated region
    $region26: #{tpu_custom_call.1} parent=1 // pred_check
      _
    $region27: #{tpu_custom_call.1} parent=1 // pred_check_branch
      %155 = sbr.rel (0) target = $region29
    $region28: #{tpu_custom_call.1} parent=1 // pred_region
      %s157 = ssub.s32 256, 256
      %158 = vsyncadd [#allocation11], %s157
      %s160 = sshll.u32 [#allocation10], 4
      %s161 = int_to_ptr.vmem [resolvable:$true] %s160
      %163 = dma.vmem_to_hbm [thread:$0]  %s161, 256, %s3, [#allocation11]
    $region29: #{tpu_custom_call.1} parent=1 // pred_fallthru
      _
    // Predicated region
    $region30: #{tpu_custom_call.1} parent=1 // pred_check
      _
    $region31: #{tpu_custom_call.1} parent=1 // pred_check_branch
      %165 = sbr.rel (0) target = $region33
    $region32: #{tpu_custom_call.1} parent=1 // pred_region
      %s167 = ssub.s32 256, 256
      %168 = vsyncadd [#allocation11], %s167
      %s170 = sshll.u32 [#allocation12], 4
      %s171 = int_to_ptr.vmem [resolvable:$true] %s170
      %173 = dma.vmem_to_hbm [thread:$0]  %s171, 256, %s4, [#allocation11]
    $region33: #{tpu_custom_call.1} parent=1 // pred_fallthru
      _
    // Predicated region
    $region34: #{tpu_custom_call.1} parent=1 // pred_check
      _
    $region35: #{tpu_custom_call.1} parent=1 // pred_check_branch
      %175 = sbr.rel (0) target = $region37
    $region36: #{tpu_custom_call.1} parent=1 // pred_region
      %s177 = ssub.s32 128, 128
      %178 = vsyncadd [#allocation14], %s177
      %s180 = sshll.u32 [#allocation13], 4
      %s181 = int_to_ptr.vmem [resolvable:$true] %s180
      %183 = dma.vmem_to_hbm [thread:$0]  %s181, 128, %s5, [#allocation14]
    $region37: #{tpu_custom_call.1} parent=1 // pred_fallthru
      _
    // Predicated region
    $region38: #{tpu_custom_call.1} parent=1 // pred_check
      _
    $region39: #{tpu_custom_call.1} parent=1 // pred_check_branch
      %185 = sbr.rel (0) target = $region41
    $region40: #{tpu_custom_call.1} parent=1 // pred_region
      %186 = dma.done [#allocation6], 256
    $region41: #{tpu_custom_call.1} parent=1 // pred_fallthru
      _
    // Predicated region
    $region42: #{tpu_custom_call.1} parent=1 // pred_check
      _
    $region43: #{tpu_custom_call.1} parent=1 // pred_check_branch
      %188 = sbr.rel (0) target = $region45
    $region44: #{tpu_custom_call.1} parent=1 // pred_region
      %189 = dma.done [#allocation11], 256
    $region45: #{tpu_custom_call.1} parent=1 // pred_fallthru
      _
    // Predicated region
    $region46: #{tpu_custom_call.1} parent=1 // pred_check
      _
    $region47: #{tpu_custom_call.1} parent=1 // pred_check_branch
      %191 = sbr.rel (0) target = $region49
    $region48: #{tpu_custom_call.1} parent=1 // pred_region
      %192 = dma.done [#allocation11], 256
    $region49: #{tpu_custom_call.1} parent=1 // pred_fallthru
      _
    // Predicated region
    $region50: #{tpu_custom_call.1} parent=1 // pred_check
      _
    $region51: #{tpu_custom_call.1} parent=1 // pred_check_branch
      %194 = sbr.rel (0) target = $region53
    $region52: #{tpu_custom_call.1} parent=1 // pred_region
      %195 = dma.done [#allocation14], 128
    $region53: #{tpu_custom_call.1} parent=1 // pred_fallthru
      _
    %196 = vsyncpa [#allocation5], 1
    %197 = vsyncpa [#allocation8], 1
    %198 = vsyncpa [#allocation6], 1
    %199 = vsyncpa [#allocation11], 1
    %200 = vsyncpa [#allocation14], 1

</llo_original>
